<compile_context>
chip_gen: v7x
topology: tpu7x:2x2x1
jax: 0.10.0
libtpu: 0.0.40
codegen_flags: <defaults>
</compile_context>

<pallas_src>
import jax
import jax.numpy as jnp
from jax import lax
from jax.experimental import pallas as pl
from jax.experimental.pallas import tpu as pltpu


def _round_up(x, m):
    return (x + m - 1) // m * m


def _make_skipgram_kernel(batch, tile_b, num_neg, embed_dim):
    B, TB, K, D = batch, tile_b, num_neg, embed_dim

    def kernel(wids_ref, vids_ref, negids_ref,      # scalar prefetch (SMEM)
               emb_hbm, vemb_hbm,                   # full tables (HBM / ANY)
               out_ref,                             # (1, 1) f32 accumulator
               w_buf, v_buf, neg_buf, sems):        # VMEM scratch + DMA sems
        i = pl.program_id(0)
        n = pl.num_programs(0)
        slot = lax.rem(i, 2)

        # ---- manual gather DMA: one row per descriptor, per-slot semaphores ----
        def issue_tile(tile, dst_slot):
            start = tile * TB

            @pl.loop(0, TB)
            def _(r):
                wrow = wids_ref[start + r]
                pltpu.make_async_copy(
                    emb_hbm.at[pl.ds(wrow, 1)],
                    w_buf.at[dst_slot, pl.ds(r, 1)],
                    sems.at[0, dst_slot]).start()
                vrow = vids_ref[start + r]
                pltpu.make_async_copy(
                    vemb_hbm.at[pl.ds(vrow, 1)],
                    v_buf.at[dst_slot, pl.ds(r, 1)],
                    sems.at[1, dst_slot]).start()

                @pl.loop(0, K)
                def _(k):
                    nrow = negids_ref[(start + r) * K + k]
                    pltpu.make_async_copy(
                        vemb_hbm.at[pl.ds(nrow, 1)],
                        neg_buf.at[dst_slot, r, pl.ds(k, 1)],
                        sems.at[2, dst_slot]).start()

        def wait_tile(dst_slot):
            # One wait per issued copy; dummy descriptors only carry the
            # (identical) per-row transfer size + semaphore.
            @pl.loop(0, TB)
            def _(r):
                pltpu.make_async_copy(
                    emb_hbm.at[pl.ds(0, 1)],
                    w_buf.at[dst_slot, pl.ds(0, 1)],
                    sems.at[0, dst_slot]).wait()
                pltpu.make_async_copy(
                    vemb_hbm.at[pl.ds(0, 1)],
                    v_buf.at[dst_slot, pl.ds(0, 1)],
                    sems.at[1, dst_slot]).wait()

            @pl.loop(0, TB * K)
            def _(j):
                pltpu.make_async_copy(
                    vemb_hbm.at[pl.ds(0, 1)],
                    neg_buf.at[dst_slot, 0, pl.ds(0, 1)],
                    sems.at[2, dst_slot]).wait()

        # ---- init + prime the pipeline ----
        @pl.when(i == 0)
        def _():
            out_ref[...] = jnp.zeros_like(out_ref)
            issue_tile(i, 0)

        # prefetch next tile into the other slot (overlaps current compute/wait)
        @pl.when(i + 1 < n)
        def _():
            issue_tile(i + 1, 1 - slot)

        wait_tile(slot)

        # ---- compute (all f32 on VPU/XLU; MXU not needed) ----
        w = w_buf[slot].astype(jnp.float32)        # [TB, D]
        v = v_buf[slot].astype(jnp.float32)        # [TB, D]
        neg = neg_buf[slot].astype(jnp.float32)    # [TB, K, D]

        ctx = jnp.sum(w * v, axis=1, keepdims=True)             # [TB, 1]
        ctx = jnp.clip(ctx, -10.0, 10.0)
        ctx_loss = jnp.log1p(jnp.exp(-ctx))                     # -logsigmoid(x)

        # neg_score[b, k] = <neg[b, k, :], w[b, :]>  (VPU mul + lane reduce)
        neg_score = jnp.sum(neg * w[:, None, :], axis=-1)       # [TB, K]
        neg_score = jnp.clip(neg_score, -10.0, 10.0)
        neg_loss = jnp.sum(jnp.log1p(jnp.exp(neg_score)),       # -logsigmoid(-x)
                           axis=1, keepdims=True)               # [TB, 1]

        per_example = ctx_loss + neg_loss                        # [TB, 1]

        # mask padded rows of the last tile so the mean stays unbiased
        row = lax.broadcasted_iota(jnp.int32, (TB, 1), 0) + i * TB
        per_example = jnp.where(row < B, per_example, 0.0)

        out_ref[...] += jnp.sum(per_example, axis=0, keepdims=True)

        @pl.when(i == n - 1)
        def _():
            out_ref[...] = out_ref[...] * (1.0 / float(B))

    return kernel


def skipgram_forward(embedding, v_embedding, wids, vids, neg_vids, *, tile_b=None):
    """Fused gather + SkipGram negative-sampling loss. Returns a scalar."""
    _, D = embedding.shape
    B = wids.shape[0]
    K = neg_vids.shape[1]

    itemsize = max(jnp.dtype(embedding.dtype).itemsize,
                   jnp.dtype(v_embedding.dtype).itemsize)
    if tile_b is None:
        # keep double-buffered scratch (2 slots x (2 + K) rows x D) well under
        # the scoped VMEM limit on every TPU generation (incl. v7x's 64 MiB)
        budget = 8 * 1024 * 1024
        tile_b = max(8, min(256, budget // (2 * (2 + K) * D * itemsize)))
    TB = _round_up(min(tile_b, _round_up(B, 8)), 8)
    B_pad = _round_up(B, TB)
    num_tiles = B_pad // TB
    pad = B_pad - B

    wids_p = jnp.pad(wids.astype(jnp.int32), (0, pad))
    vids_p = jnp.pad(vids.astype(jnp.int32), (0, pad))
    negids_p = jnp.pad(neg_vids.astype(jnp.int32), ((0, pad), (0, 0))).reshape(-1)

    kernel = _make_skipgram_kernel(B, TB, K, D)

    grid_spec = pltpu.PrefetchScalarGridSpec(
        num_scalar_prefetch=3,
        grid=(num_tiles,),
        in_specs=[
            pl.BlockSpec(memory_space=pl.ANY),   # embedding table, stays in HBM
            pl.BlockSpec(memory_space=pl.ANY),   # v_embedding table, stays in HBM
        ],
        out_specs=pl.BlockSpec((1, 1), lambda i, *_: (0, 0)),
        scratch_shapes=[
            pltpu.VMEM((2, TB, D), embedding.dtype),        # w rows (dbl buf)
            pltpu.VMEM((2, TB, D), v_embedding.dtype),      # v rows
            pltpu.VMEM((2, TB, K, D), v_embedding.dtype),   # neg rows
            pltpu.SemaphoreType.DMA((3, 2)),                # per stream x slot
        ],
    )

    out = pl.pallas_call(
        kernel,
        out_shape=jax.ShapeDtypeStruct((1, 1), jnp.float32),
        grid_spec=grid_spec,
        compiler_params=pltpu.CompilerParams(
            dimension_semantics=("arbitrary",),  # accumulator + dbl-buffer state
        ),
    )(wids_p, vids_p, negids_p, embedding, v_embedding)
    return out[0, 0]


def skipgram_reference(embedding, v_embedding, wids, vids, neg_vids):
    # Pure-JAX reference mirroring the PyTorch forward exactly.
    w = embedding[wids].astype(jnp.float32)
    v = v_embedding[vids].astype(jnp.float32)
    neg = v_embedding[neg_vids].astype(jnp.float32)
    ctx = jnp.clip(jnp.sum(w * v, axis=1), -10.0, 10.0)
    ctx = -jax.nn.log_sigmoid(ctx)
    neg_score = jnp.clip(jnp.einsum("bkd,bd->bk", neg, w), -10.0, 10.0)
    neg_s = -jnp.sum(jax.nn.log_sigmoid(-neg_score), axis=1)
    return jnp.mean(ctx + neg_s)


if __name__ == "__main__":
    vocab_size = 64
    embed_dim = 128
    batch = 20          # not a multiple of the tile -> exercises padding/masking
    num_neg = 8

    key = jax.random.PRNGKey(0)
    k_emb, k_vemb, k_wid, k_vid, k_neg = jax.random.split(key, 5)

    # Module init is U(-1/D, 1/D) for embedding, zeros for v_embedding.  Use a
    # small random (non-zero) v_embedding here so the check actually exercises
    # the fused gather / negative-sample path (all-zeros would be vacuous).
    init_range = 1.0 / embed_dim
    embedding = jax.random.uniform(
        k_emb, (vocab_size, embed_dim), jnp.float32, -init_range, init_range
    )
    v_embedding = jax.random.uniform(
        k_vemb, (vocab_size, embed_dim), jnp.float32, -init_range, init_range
    )

    wids = jax.random.randint(k_wid, (batch,), 0, vocab_size)
    vids = jax.random.randint(k_vid, (batch,), 0, vocab_size)
    neg_vids = jax.random.randint(k_neg, (batch, num_neg), 0, vocab_size)

    # tile_b=8 -> 3 batch tiles: exercises double-buffered gather, accumulation
    # across grid steps, and masking of the 4 padded rows in the last tile.
    loss = jax.block_until_ready(
        skipgram_forward(embedding, v_embedding, wids, vids, neg_vids, tile_b=8)
    )
    ref = jax.block_until_ready(
        skipgram_reference(embedding, v_embedding, wids, vids, neg_vids)
    )

    assert jnp.allclose(loss, ref, rtol=1e-5, atol=1e-5), (loss, ref)
    print("KERNEL_OK")
</pallas_src>

<mosaic_0001>
module attributes {stable_mosaic.version = 11 : i64} {
  func.func @kernel(%arg0: i32, %arg1: memref<24xi32, #tpu.memory_space<smem>>, %arg2: memref<24xi32, #tpu.memory_space<smem>>, %arg3: memref<192xi32, #tpu.memory_space<smem>>, %arg4: memref<64x128xf32, #tpu.memory_space<any>>, %arg5: memref<64x128xf32, #tpu.memory_space<any>>, %arg6: memref<1x1xf32, #tpu.memory_space<vmem>>, %arg7: memref<2x8x128xf32, #tpu.memory_space<vmem>>, %arg8: memref<2x8x128xf32, #tpu.memory_space<vmem>>, %arg9: memref<2x8x8x128xf32, #tpu.memory_space<vmem>>, %arg10: memref<3x2x!tpu.dma_semaphore, #tpu.memory_space<semaphore_mem>>) attributes {dimension_semantics = [#tpu.dimension_semantics<arbitrary>], iteration_bounds = array<i64: 3>, scalar_prefetch = 3 : i64, scratch_operands = 4 : i64, tpu.core_type = #tpu.core_type<tc>, window_params = [{}, {}, {pipeline_mode = #tpu.pipeline_mode<synchronous>, transform_indices = @transform_2, window_bounds = array<i64: 1, 1>}]} {
    %c2_i32 = arith.constant 2 : i32
    %0 = arith.remsi %arg0, %c2_i32 : i32
    %c0_i32 = arith.constant 0 : i32
    %1 = arith.cmpi eq, %arg0, %c0_i32 : i32
    %2 = arith.extui %1 : i1 to i32
    %c0_i32_0 = arith.constant 0 : i32
    %3 = arith.cmpi ne, %2, %c0_i32_0 : i32
    scf.if %3 {
      %cst_28 = arith.constant 0.000000e+00 : f32
      %59 = vector.broadcast %cst_28 : f32 to vector<1x1xf32>
      %c0_29 = arith.constant 0 : index
      %c0_30 = arith.constant 0 : index
      %60 = vector.load %arg6[%c0_29, %c0_30] : memref<1x1xf32, #tpu.memory_space<vmem>>, vector<1x1xf32>
      tpu.vector_store %arg6[%c0_29, %c0_30], %59 {strides = array<i32>} : memref<1x1xf32, #tpu.memory_space<vmem>>, vector<1x1xf32>,
      %c8_i32_31 = arith.constant 8 : i32
      %61 = arith.muli %arg0, %c8_i32_31 : i32
      %c0_i32_32 = arith.constant 0 : i32
      %c8_i32_33 = arith.constant 8 : i32
      %62 = arith.addi %c0_i32_32, %c8_i32_33 : i32
      %c1_i32_34 = arith.constant 1 : i32
      scf.for %arg11 = %c0_i32_32 to %62 step %c1_i32_34  : i32 {
        %c1_i32_36 = arith.constant 1 : i32
        %63 = arith.muli %arg11, %c1_i32_36 : i32
        %c0_i32_37 = arith.constant 0 : i32
        %64 = arith.addi %c0_i32_37, %63 : i32
        %65 = arith.addi %61, %64 : i32
        %66 = arith.index_cast %65 : i32 to index
        %67 = memref.load %arg1[%66] : memref<24xi32, #tpu.memory_space<smem>>
        %c0_i32_38 = arith.constant 0 : i32
        %c0_i32_39 = arith.constant 0 : i32
        %c0_i32_40 = arith.constant 0 : i32
        %c0_i32_41 = arith.constant 0 : i32
        %68 = tpu.memref_slice %arg4[%67, %c0_i32_41] : memref<64x128xf32, #tpu.memory_space<any>> -> memref<1x128xf32, #tpu.memory_space<any>>
        %c0_i32_42 = arith.constant 0 : i32
        %69 = tpu.memref_slice %arg7[%c0_i32_38, %64, %c0_i32_42] : memref<2x8x128xf32, #tpu.memory_space<vmem>> -> memref<1x1x128xf32, #tpu.memory_space<vmem>>
        %70 = tpu.memref_squeeze %69 : memref<1x1x128xf32, #tpu.memory_space<vmem>> -> memref<1x128xf32, #tpu.memory_space<vmem>>
        %71 = tpu.memref_slice %arg10[%c0_i32_39, %c0_i32_40] : memref<3x2x!tpu.dma_semaphore, #tpu.memory_space<semaphore_mem>> -> memref<1x1x!tpu.dma_semaphore, #tpu.memory_space<semaphore_mem>>
        %72 = tpu.memref_squeeze %71 : memref<1x1x!tpu.dma_semaphore, #tpu.memory_space<semaphore_mem>> -> memref<!tpu.dma_semaphore, #tpu.memory_space<semaphore_mem>>
        tpu.enqueue_dma source(%68 : memref<1x128xf32, #tpu.memory_space<any>>) target(%70 : memref<1x128xf32, #tpu.memory_space<vmem>>) target_semaphore(%72 : memref<!tpu.dma_semaphore, #tpu.memory_space<semaphore_mem>>)
        %73 = arith.addi %61, %64 : i32
        %74 = arith.index_cast %73 : i32 to index
        %75 = memref.load %arg2[%74] : memref<24xi32, #tpu.memory_space<smem>>
        %c0_i32_43 = arith.constant 0 : i32
        %c1_i32_44 = arith.constant 1 : i32
        %c0_i32_45 = arith.constant 0 : i32
        %c0_i32_46 = arith.constant 0 : i32
        %76 = tpu.memref_slice %arg5[%75, %c0_i32_46] : memref<64x128xf32, #tpu.memory_space<any>> -> memref<1x128xf32, #tpu.memory_space<any>>
        %c0_i32_47 = arith.constant 0 : i32
        %77 = tpu.memref_slice %arg8[%c0_i32_43, %64, %c0_i32_47] : memref<2x8x128xf32, #tpu.memory_space<vmem>> -> memref<1x1x128xf32, #tpu.memory_space<vmem>>
        %78 = tpu.memref_squeeze %77 : memref<1x1x128xf32, #tpu.memory_space<vmem>> -> memref<1x128xf32, #tpu.memory_space<vmem>>
        %79 = tpu.memref_slice %arg10[%c1_i32_44, %c0_i32_45] : memref<3x2x!tpu.dma_semaphore, #tpu.memory_space<semaphore_mem>> -> memref<1x1x!tpu.dma_semaphore, #tpu.memory_space<semaphore_mem>>
        %80 = tpu.memref_squeeze %79 : memref<1x1x!tpu.dma_semaphore, #tpu.memory_space<semaphore_mem>> -> memref<!tpu.dma_semaphore, #tpu.memory_space<semaphore_mem>>
        tpu.enqueue_dma source(%76 : memref<1x128xf32, #tpu.memory_space<any>>) target(%78 : memref<1x128xf32, #tpu.memory_space<vmem>>) target_semaphore(%80 : memref<!tpu.dma_semaphore, #tpu.memory_space<semaphore_mem>>)
        %c0_i32_48 = arith.constant 0 : i32
        %c8_i32_49 = arith.constant 8 : i32
        %81 = arith.addi %c0_i32_48, %c8_i32_49 : i32
        %c1_i32_50 = arith.constant 1 : i32
        scf.for %arg12 = %c0_i32_48 to %81 step %c1_i32_50  : i32 {
          %c1_i32_52 = arith.constant 1 : i32
          %82 = arith.muli %arg12, %c1_i32_52 : i32
          %c0_i32_53 = arith.constant 0 : i32
          %83 = arith.addi %c0_i32_53, %82 : i32
          %84 = arith.addi %61, %64 : i32
          %c8_i32_54 = arith.constant 8 : i32
          %85 = arith.muli %84, %c8_i32_54 : i32
          %86 = arith.addi %85, %83 : i32
          %87 = arith.index_cast %86 : i32 to index
          %88 = memref.load %arg3[%87] : memref<192xi32, #tpu.memory_space<smem>>
          %c0_i32_55 = arith.constant 0 : i32
          %c2_i32_56 = arith.constant 2 : i32
          %c0_i32_57 = arith.constant 0 : i32
          %c0_i32_58 = arith.constant 0 : i32
          %89 = tpu.memref_slice %arg5[%88, %c0_i32_58] : memref<64x128xf32, #tpu.memory_space<any>> -> memref<1x128xf32, #tpu.memory_space<any>>
          %c0_i32_59 = arith.constant 0 : i32
          %90 = tpu.memref_slice %arg9[%c0_i32_55, %64, %83, %c0_i32_59] : memref<2x8x8x128xf32, #tpu.memory_space<vmem>> -> memref<1x1x1x128xf32, #tpu.memory_space<vmem>>
          %91 = tpu.memref_squeeze %90 : memref<1x1x1x128xf32, #tpu.memory_space<vmem>> -> memref<1x128xf32, #tpu.memory_space<vmem>>
          %92 = tpu.memref_slice %arg10[%c2_i32_56, %c0_i32_57] : memref<3x2x!tpu.dma_semaphore, #tpu.memory_space<semaphore_mem>> -> memref<1x1x!tpu.dma_semaphore, #tpu.memory_space<semaphore_mem>>
          %93 = tpu.memref_squeeze %92 : memref<1x1x!tpu.dma_semaphore, #tpu.memory_space<semaphore_mem>> -> memref<!tpu.dma_semaphore, #tpu.memory_space<semaphore_mem>>
          tpu.enqueue_dma source(%89 : memref<1x128xf32, #tpu.memory_space<any>>) target(%91 : memref<1x128xf32, #tpu.memory_space<vmem>>) target_semaphore(%93 : memref<!tpu.dma_semaphore, #tpu.memory_space<semaphore_mem>>)
        }
        %c8_i32_51 = arith.constant 8 : i32
      }
      %c8_i32_35 = arith.constant 8 : i32
    } else {
    }
    %c1_i32 = arith.constant 1 : i32
    %4 = arith.addi %arg0, %c1_i32 : i32
    %c3_i32 = arith.constant 3 : i32
    %5 = arith.cmpi slt, %4, %c3_i32 : i32
    %6 = arith.extui %5 : i1 to i32
    %c0_i32_1 = arith.constant 0 : i32
    %7 = arith.cmpi ne, %6, %c0_i32_1 : i32
    scf.if %7 {
      %c1_i32_28 = arith.constant 1 : i32
      %59 = arith.addi %arg0, %c1_i32_28 : i32
      %c1_i32_29 = arith.constant 1 : i32
      %60 = arith.subi %c1_i32_29, %0 : i32
      %c8_i32_30 = arith.constant 8 : i32
      %61 = arith.muli %59, %c8_i32_30 : i32
      %c0_i32_31 = arith.constant 0 : i32
      %c8_i32_32 = arith.constant 8 : i32
      %62 = arith.addi %c0_i32_31, %c8_i32_32 : i32
      %c1_i32_33 = arith.constant 1 : i32
      scf.for %arg11 = %c0_i32_31 to %62 step %c1_i32_33  : i32 {
        %c1_i32_35 = arith.constant 1 : i32
        %63 = arith.muli %arg11, %c1_i32_35 : i32
        %c0_i32_36 = arith.constant 0 : i32
        %64 = arith.addi %c0_i32_36, %63 : i32
        %65 = arith.addi %61, %64 : i32
        %66 = arith.index_cast %65 : i32 to index
        %67 = memref.load %arg1[%66] : memref<24xi32, #tpu.memory_space<smem>>
        %c0_i32_37 = arith.constant 0 : i32
        %c0_i32_38 = arith.constant 0 : i32
        %68 = tpu.memref_slice %arg4[%67, %c0_i32_38] : memref<64x128xf32, #tpu.memory_space<any>> -> memref<1x128xf32, #tpu.memory_space<any>>
        %c0_i32_39 = arith.constant 0 : i32
        %69 = tpu.memref_slice %arg7[%60, %64, %c0_i32_39] : memref<2x8x128xf32, #tpu.memory_space<vmem>> -> memref<1x1x128xf32, #tpu.memory_space<vmem>>
        %70 = tpu.memref_squeeze %69 : memref<1x1x128xf32, #tpu.memory_space<vmem>> -> memref<1x128xf32, #tpu.memory_space<vmem>>
        %71 = tpu.memref_slice %arg10[%c0_i32_37, %60] : memref<3x2x!tpu.dma_semaphore, #tpu.memory_space<semaphore_mem>> -> memref<1x1x!tpu.dma_semaphore, #tpu.memory_space<semaphore_mem>>
        %72 = tpu.memref_squeeze %71 : memref<1x1x!tpu.dma_semaphore, #tpu.memory_space<semaphore_mem>> -> memref<!tpu.dma_semaphore, #tpu.memory_space<semaphore_mem>>
        tpu.enqueue_dma source(%68 : memref<1x128xf32, #tpu.memory_space<any>>) target(%70 : memref<1x128xf32, #tpu.memory_space<vmem>>) target_semaphore(%72 : memref<!tpu.dma_semaphore, #tpu.memory_space<semaphore_mem>>)
        %73 = arith.addi %61, %64 : i32
        %74 = arith.index_cast %73 : i32 to index
        %75 = memref.load %arg2[%74] : memref<24xi32, #tpu.memory_space<smem>>
        %c1_i32_40 = arith.constant 1 : i32
        %c0_i32_41 = arith.constant 0 : i32
        %76 = tpu.memref_slice %arg5[%75, %c0_i32_41] : memref<64x128xf32, #tpu.memory_space<any>> -> memref<1x128xf32, #tpu.memory_space<any>>
        %c0_i32_42 = arith.constant 0 : i32
        %77 = tpu.memref_slice %arg8[%60, %64, %c0_i32_42] : memref<2x8x128xf32, #tpu.memory_space<vmem>> -> memref<1x1x128xf32, #tpu.memory_space<vmem>>
        %78 = tpu.memref_squeeze %77 : memref<1x1x128xf32, #tpu.memory_space<vmem>> -> memref<1x128xf32, #tpu.memory_space<vmem>>
        %79 = tpu.memref_slice %arg10[%c1_i32_40, %60] : memref<3x2x!tpu.dma_semaphore, #tpu.memory_space<semaphore_mem>> -> memref<1x1x!tpu.dma_semaphore, #tpu.memory_space<semaphore_mem>>
        %80 = tpu.memref_squeeze %79 : memref<1x1x!tpu.dma_semaphore, #tpu.memory_space<semaphore_mem>> -> memref<!tpu.dma_semaphore, #tpu.memory_space<semaphore_mem>>
        tpu.enqueue_dma source(%76 : memref<1x128xf32, #tpu.memory_space<any>>) target(%78 : memref<1x128xf32, #tpu.memory_space<vmem>>) target_semaphore(%80 : memref<!tpu.dma_semaphore, #tpu.memory_space<semaphore_mem>>)
        %c0_i32_43 = arith.constant 0 : i32
        %c8_i32_44 = arith.constant 8 : i32
        %81 = arith.addi %c0_i32_43, %c8_i32_44 : i32
        %c1_i32_45 = arith.constant 1 : i32
        scf.for %arg12 = %c0_i32_43 to %81 step %c1_i32_45  : i32 {
          %c1_i32_47 = arith.constant 1 : i32
          %82 = arith.muli %arg12, %c1_i32_47 : i32
          %c0_i32_48 = arith.constant 0 : i32
          %83 = arith.addi %c0_i32_48, %82 : i32
          %84 = arith.addi %61, %64 : i32
          %c8_i32_49 = arith.constant 8 : i32
          %85 = arith.muli %84, %c8_i32_49 : i32
          %86 = arith.addi %85, %83 : i32
          %87 = arith.index_cast %86 : i32 to index
          %88 = memref.load %arg3[%87] : memref<192xi32, #tpu.memory_space<smem>>
          %c2_i32_50 = arith.constant 2 : i32
          %c0_i32_51 = arith.constant 0 : i32
          %89 = tpu.memref_slice %arg5[%88, %c0_i32_51] : memref<64x128xf32, #tpu.memory_space<any>> -> memref<1x128xf32, #tpu.memory_space<any>>
          %c0_i32_52 = arith.constant 0 : i32
          %90 = tpu.memref_slice %arg9[%60, %64, %83, %c0_i32_52] : memref<2x8x8x128xf32, #tpu.memory_space<vmem>> -> memref<1x1x1x128xf32, #tpu.memory_space<vmem>>
          %91 = tpu.memref_squeeze %90 : memref<1x1x1x128xf32, #tpu.memory_space<vmem>> -> memref<1x128xf32, #tpu.memory_space<vmem>>
          %92 = tpu.memref_slice %arg10[%c2_i32_50, %60] : memref<3x2x!tpu.dma_semaphore, #tpu.memory_space<semaphore_mem>> -> memref<1x1x!tpu.dma_semaphore, #tpu.memory_space<semaphore_mem>>
          %93 = tpu.memref_squeeze %92 : memref<1x1x!tpu.dma_semaphore, #tpu.memory_space<semaphore_mem>> -> memref<!tpu.dma_semaphore, #tpu.memory_space<semaphore_mem>>
          tpu.enqueue_dma source(%89 : memref<1x128xf32, #tpu.memory_space<any>>) target(%91 : memref<1x128xf32, #tpu.memory_space<vmem>>) target_semaphore(%93 : memref<!tpu.dma_semaphore, #tpu.memory_space<semaphore_mem>>)
        }
        %c8_i32_46 = arith.constant 8 : i32
      }
      %c8_i32_34 = arith.constant 8 : i32
    } else {
    }
    %c0_i32_2 = arith.constant 0 : i32
    %c8_i32 = arith.constant 8 : i32
    %8 = arith.addi %c0_i32_2, %c8_i32 : i32
    %c1_i32_3 = arith.constant 1 : i32
    scf.for %arg11 = %c0_i32_2 to %8 step %c1_i32_3  : i32 {
      %c0_i32_28 = arith.constant 0 : i32
      %c0_i32_29 = arith.constant 0 : i32
      %c0_i32_30 = arith.constant 0 : i32
      %59 = tpu.memref_slice %arg4[%c0_i32_29, %c0_i32_30] : memref<64x128xf32, #tpu.memory_space<any>> -> memref<1x128xf32, #tpu.memory_space<any>>
      %c0_i32_31 = arith.constant 0 : i32
      %c0_i32_32 = arith.constant 0 : i32
      %60 = tpu.memref_slice %arg7[%0, %c0_i32_31, %c0_i32_32] : memref<2x8x128xf32, #tpu.memory_space<vmem>> -> memref<1x1x128xf32, #tpu.memory_space<vmem>>
      %61 = tpu.memref_squeeze %60 : memref<1x1x128xf32, #tpu.memory_space<vmem>> -> memref<1x128xf32, #tpu.memory_space<vmem>>
      %62 = tpu.memref_slice %arg10[%c0_i32_28, %0] : memref<3x2x!tpu.dma_semaphore, #tpu.memory_space<semaphore_mem>> -> memref<1x1x!tpu.dma_semaphore, #tpu.memory_space<semaphore_mem>>
      %63 = tpu.memref_squeeze %62 : memref<1x1x!tpu.dma_semaphore, #tpu.memory_space<semaphore_mem>> -> memref<!tpu.dma_semaphore, #tpu.memory_space<semaphore_mem>>
      tpu.wait_dma2 semaphore(%63 : memref<!tpu.dma_semaphore, #tpu.memory_space<semaphore_mem>>) src(%59 : memref<1x128xf32, #tpu.memory_space<any>>) dst(%61 : memref<1x128xf32, #tpu.memory_space<vmem>>)
      %c1_i32_33 = arith.constant 1 : i32
      %c0_i32_34 = arith.constant 0 : i32
      %c0_i32_35 = arith.constant 0 : i32
      %64 = tpu.memref_slice %arg5[%c0_i32_34, %c0_i32_35] : memref<64x128xf32, #tpu.memory_space<any>> -> memref<1x128xf32, #tpu.memory_space<any>>
      %c0_i32_36 = arith.constant 0 : i32
      %c0_i32_37 = arith.constant 0 : i32
      %65 = tpu.memref_slice %arg8[%0, %c0_i32_36, %c0_i32_37] : memref<2x8x128xf32, #tpu.memory_space<vmem>> -> memref<1x1x128xf32, #tpu.memory_space<vmem>>
      %66 = tpu.memref_squeeze %65 : memref<1x1x128xf32, #tpu.memory_space<vmem>> -> memref<1x128xf32, #tpu.memory_space<vmem>>
      %67 = tpu.memref_slice %arg10[%c1_i32_33, %0] : memref<3x2x!tpu.dma_semaphore, #tpu.memory_space<semaphore_mem>> -> memref<1x1x!tpu.dma_semaphore, #tpu.memory_space<semaphore_mem>>
      %68 = tpu.memref_squeeze %67 : memref<1x1x!tpu.dma_semaphore, #tpu.memory_space<semaphore_mem>> -> memref<!tpu.dma_semaphore, #tpu.memory_space<semaphore_mem>>
      tpu.wait_dma2 semaphore(%68 : memref<!tpu.dma_semaphore, #tpu.memory_space<semaphore_mem>>) src(%64 : memref<1x128xf32, #tpu.memory_space<any>>) dst(%66 : memref<1x128xf32, #tpu.memory_space<vmem>>)
    }
    %c0_i32_4 = arith.constant 0 : i32
    %c64_i32 = arith.constant 64 : i32
    %9 = arith.addi %c0_i32_4, %c64_i32 : i32
    %c1_i32_5 = arith.constant 1 : i32
    scf.for %arg11 = %c0_i32_4 to %9 step %c1_i32_5  : i32 {
      %c0_i32_28 = arith.constant 0 : i32
      %c2_i32_29 = arith.constant 2 : i32
      %c0_i32_30 = arith.constant 0 : i32
      %c0_i32_31 = arith.constant 0 : i32
      %59 = tpu.memref_slice %arg5[%c0_i32_30, %c0_i32_31] : memref<64x128xf32, #tpu.memory_space<any>> -> memref<1x128xf32, #tpu.memory_space<any>>
      %c0_i32_32 = arith.constant 0 : i32
      %c0_i32_33 = arith.constant 0 : i32
      %60 = tpu.memref_slice %arg9[%0, %c0_i32_28, %c0_i32_32, %c0_i32_33] : memref<2x8x8x128xf32, #tpu.memory_space<vmem>> -> memref<1x1x1x128xf32, #tpu.memory_space<vmem>>
      %61 = tpu.memref_squeeze %60 : memref<1x1x1x128xf32, #tpu.memory_space<vmem>> -> memref<1x128xf32, #tpu.memory_space<vmem>>
      %62 = tpu.memref_slice %arg10[%c2_i32_29, %0] : memref<3x2x!tpu.dma_semaphore, #tpu.memory_space<semaphore_mem>> -> memref<1x1x!tpu.dma_semaphore, #tpu.memory_space<semaphore_mem>>
      %63 = tpu.memref_squeeze %62 : memref<1x1x!tpu.dma_semaphore, #tpu.memory_space<semaphore_mem>> -> memref<!tpu.dma_semaphore, #tpu.memory_space<semaphore_mem>>
      tpu.wait_dma2 semaphore(%63 : memref<!tpu.dma_semaphore, #tpu.memory_space<semaphore_mem>>) src(%59 : memref<1x128xf32, #tpu.memory_space<any>>) dst(%61 : memref<1x128xf32, #tpu.memory_space<vmem>>)
    }
    %10 = arith.index_cast %0 : i32 to index
    %c0 = arith.constant 0 : index
    %c0_6 = arith.constant 0 : index
    %11 = vector.load %arg7[%10, %c0, %c0_6] : memref<2x8x128xf32, #tpu.memory_space<vmem>>, vector<1x8x128xf32>
    %12 = vector.shape_cast %11 : vector<1x8x128xf32> to vector<8x128xf32>
    %13 = arith.index_cast %0 : i32 to index
    %c0_7 = arith.constant 0 : index
    %c0_8 = arith.constant 0 : index
    %14 = vector.load %arg8[%13, %c0_7, %c0_8] : memref<2x8x128xf32, #tpu.memory_space<vmem>>, vector<1x8x128xf32>
    %15 = vector.shape_cast %14 : vector<1x8x128xf32> to vector<8x128xf32>
    %16 = arith.index_cast %0 : i32 to index
    %c0_9 = arith.constant 0 : index
    %c0_10 = arith.constant 0 : index
    %c0_11 = arith.constant 0 : index
    %17 = vector.load %arg9[%16, %c0_9, %c0_10, %c0_11] : memref<2x8x8x128xf32, #tpu.memory_space<vmem>>, vector<1x8x8x128xf32>
    %18 = vector.shape_cast %17 : vector<1x8x8x128xf32> to vector<8x8x128xf32>
    %19 = arith.mulf %12, %15 : vector<8x128xf32>
    %cst = arith.constant dense<0.000000e+00> : vector<8xf32>
    %20 = vector.multi_reduction <add>, %19, %cst [1] : vector<8x128xf32> to vector<8xf32>
    %21 = vector.shape_cast %20 : vector<8xf32> to vector<8x1xf32>
    %cst_12 = arith.constant -1.000000e+01 : f32
    %cst_13 = arith.constant 1.000000e+01 : f32
    %22 = vector.broadcast %cst_12 : f32 to vector<8x1xf32>
    %23 = arith.maximumf %22, %21 : vector<8x1xf32>
    %24 = vector.broadcast %cst_13 : f32 to vector<8x1xf32>
    %25 = arith.minimumf %24, %23 : vector<8x1xf32>
    %cst_14 = arith.constant 0.000000e+00 : f32
    %26 = vector.broadcast %cst_14 : f32 to vector<8x1xf32>
    %27 = arith.subf %26, %25 : vector<8x1xf32>
    %28 = math.exp %27 : vector<8x1xf32>
    %29 = math.log1p %28 : vector<8x1xf32>
    %30 = vector.shape_cast %12 : vector<8x128xf32> to vector<8x1x128xf32>
    %31 = vector.broadcast %30 : vector<8x1x128xf32> to vector<8x8x128xf32>
    %32 = arith.mulf %18, %31 : vector<8x8x128xf32>
    %cst_15 = arith.constant dense<0.000000e+00> : vector<8x8xf32>
    %33 = vector.multi_reduction <add>, %32, %cst_15 [2] : vector<8x8x128xf32> to vector<8x8xf32>
    %cst_16 = arith.constant -1.000000e+01 : f32
    %cst_17 = arith.constant 1.000000e+01 : f32
    %34 = vector.broadcast %cst_16 : f32 to vector<8x8xf32>
    %35 = arith.maximumf %34, %33 : vector<8x8xf32>
    %36 = vector.broadcast %cst_17 : f32 to vector<8x8xf32>
    %37 = arith.minimumf %36, %35 : vector<8x8xf32>
    %38 = math.exp %37 : vector<8x8xf32>
    %39 = math.log1p %38 : vector<8x8xf32>
    %cst_18 = arith.constant dense<0.000000e+00> : vector<8xf32>
    %40 = vector.multi_reduction <add>, %39, %cst_18 [1] : vector<8x8xf32> to vector<8xf32>
    %41 = vector.shape_cast %40 : vector<8xf32> to vector<8x1xf32>
    %42 = arith.addf %29, %41 : vector<8x1xf32>
    %43 = tpu.iota {dimensions = array<i32: 0>} : vector<8x1xi32>
    %c8_i32_19 = arith.constant 8 : i32
    %44 = arith.muli %arg0, %c8_i32_19 : i32
    %45 = vector.broadcast %44 : i32 to vector<8x1xi32>
    %46 = arith.addi %43, %45 : vector<8x1xi32>
    %c20_i32 = arith.constant 20 : i32
    %47 = vector.broadcast %c20_i32 : i32 to vector<8x1xi32>
    %48 = arith.cmpi slt, %46, %47 : vector<8x1xi32>
    %cst_20 = arith.constant 0.000000e+00 : f32
    %49 = vector.broadcast %cst_20 : f32 to vector<8x1xf32>
    %50 = arith.select %48, %42, %49 : vector<8x1xi1>, vector<8x1xf32>
    %c0_21 = arith.constant 0 : index
    %c0_22 = arith.constant 0 : index
    %51 = vector.load %arg6[%c0_21, %c0_22] : memref<1x1xf32, #tpu.memory_space<vmem>>, vector<1x1xf32>
    %cst_23 = arith.constant dense<0.000000e+00> : vector<1xf32>
    %52 = vector.multi_reduction <add>, %50, %cst_23 [0] : vector<8x1xf32> to vector<1xf32>
    %53 = vector.shape_cast %52 : vector<1xf32> to vector<1x1xf32>
    %54 = arith.addf %51, %53 : vector<1x1xf32>
    %c0_24 = arith.constant 0 : index
    %c0_25 = arith.constant 0 : index
    %55 = vector.load %arg6[%c0_24, %c0_25] : memref<1x1xf32, #tpu.memory_space<vmem>>, vector<1x1xf32>
    tpu.vector_store %arg6[%c0_24, %c0_25], %54 {strides = array<i32>} : memref<1x1xf32, #tpu.memory_space<vmem>>, vector<1x1xf32>,
    %c2_i32_26 = arith.constant 2 : i32
    %56 = arith.cmpi eq, %arg0, %c2_i32_26 : i32
    %57 = arith.extui %56 : i1 to i32
    %c0_i32_27 = arith.constant 0 : i32
    %58 = arith.cmpi ne, %57, %c0_i32_27 : i32
    scf.if %58 {
      %c0_28 = arith.constant 0 : index
      %c0_29 = arith.constant 0 : index
      %59 = vector.load %arg6[%c0_28, %c0_29] : memref<1x1xf32, #tpu.memory_space<vmem>>, vector<1x1xf32>
      %cst_30 = arith.constant 5.000000e-02 : f32
      %60 = vector.broadcast %cst_30 : f32 to vector<1x1xf32>
      %61 = arith.mulf %59, %60 : vector<1x1xf32>
      %c0_31 = arith.constant 0 : index
      %c0_32 = arith.constant 0 : index
      %62 = vector.load %arg6[%c0_31, %c0_32] : memref<1x1xf32, #tpu.memory_space<vmem>>, vector<1x1xf32>
      tpu.vector_store %arg6[%c0_31, %c0_32], %61 {strides = array<i32>} : memref<1x1xf32, #tpu.memory_space<vmem>>, vector<1x1xf32>,
    } else {
    }
    return
  }
  func.func @transform_2(%arg0: i32, %arg1: memref<24xi32, #tpu.memory_space<smem>>, %arg2: memref<24xi32, #tpu.memory_space<smem>>, %arg3: memref<192xi32, #tpu.memory_space<smem>>) -> (i32, i32) {
    %c0_i32 = arith.constant 0 : i32
    %c0_i32_0 = arith.constant 0 : i32
    %c0_i32_1 = arith.constant 0 : i32
    return %c0_i32, %c0_i32_0 : i32, i32
  }
}

</mosaic_0001>

<llo_original>
// kernel: tpu_custom_call.1
$region0: #{tpu_custom_call.1}
  #allocation0 [shape = 'u32[]', space=smem, size = 0x4, offset = 0x4, fixed_abs, tag = 'smem constant byte address 0x4 - core index']
  #allocation1 [shape = 'u32[144,128]{1,0:T(1,128)}', space=vmem, size = 0x12000, scoped, tag = 'internal scratch']
  #allocation2 [shape = 'f32[2,8,128]{2,1,0:T(8,128)}', space=vmem, size = 0x2000, scoped, tag = 'scratch operand']
  #allocation3 [shape = 'f32[2,8,128]{2,1,0:T(8,128)}', space=vmem, size = 0x2000, scoped, tag = 'scratch operand']
  #allocation4 [shape = 'f32[2,8,8,128]{3,2,1,0:T(8,128)}', space=vmem, size = 0x10000, scoped, tag = 'scratch operand']
  #allocation5 [shape = 's32[6]{0}', space=sflag, size = 0x18, scoped, tag = 'scratch operand']
  #allocation6 [shape = 's32[1]{0}', space=sflag, size = 0x4, scoped, tag = 'scoped memory for tpu_custom_call.1']
  #allocation7 [shape = 'u8[512]{0}', space=smem, size = 0x200, scoped, tag = 'prefetched SMEM operand 0']
  #allocation8 [shape = 'u8[512]{0}', space=smem, size = 0x200, scoped, tag = 'prefetched SMEM operand 1']
  #allocation9 [shape = 'u8[1024]{0}', space=smem, size = 0x400, scoped, tag = 'prefetched SMEM operand 2']
  #allocation12 [shape = 's32[]', space=sflag, size = 0x4, offset = 0, fixed_abs, tag = 'sflag constant byte address 0x0 - dummy sync flag']
  #allocation13 [shape = 's32[]', space=sflag, size = 0x4, offset = 0, fixed_abs, tag = 'sflag constant byte address 0x0 - dummy sync flag']
  #allocation14 [shape = 'u32[]', space=smem, size = 0x4, offset = 0x44, fixed_abs, tag = 'smem constant byte address 0x44 - assertion arg 0']
  #allocation15 [shape = 'u32[]', space=smem, size = 0x4, offset = 0x48, fixed_abs, tag = 'smem constant byte address 0x48 - assertion arg 1']
  #allocation16 [shape = 's32[]', space=sflag, size = 0x4, offset = 0, fixed_abs, tag = 'sflag constant byte address 0x0 - dummy sync flag']
  #allocation17 [shape = 's32[]', space=sflag, size = 0x4, offset = 0, fixed_abs, tag = 'sflag constant byte address 0x0 - dummy sync flag']
  #allocation18 [shape = 's32[]', space=sflag, size = 0x4, offset = 0, fixed_abs, tag = 'sflag constant byte address 0x0 - dummy sync flag']
  #allocation19 [shape = 's32[]', space=sflag, size = 0x4, offset = 0, fixed_abs, tag = 'sflag constant byte address 0x0 - dummy sync flag']
  #allocation20 [shape = 's32[]', space=sflag, size = 0x4, offset = 0, fixed_abs, tag = 'sflag constant byte address 0x0 - dummy sync flag']
  #allocation21 [shape = 's32[]', space=sflag, size = 0x4, offset = 0, fixed_abs, tag = 'sflag constant byte address 0x0 - dummy sync flag']
  #allocation22 [shape = 's32[]', space=sflag, size = 0x4, offset = 0, fixed_abs, tag = 'sflag constant byte address 0x0 - dummy sync flag']
  #allocation23 [shape = 's32[]', space=sflag, size = 0x4, offset = 0, fixed_abs, tag = 'sflag constant byte address 0x0 - dummy sync flag']
  #allocation24 [shape = 's32[]', space=sflag, size = 0x4, offset = 0, fixed_abs, tag = 'sflag constant byte address 0x0 - dummy sync flag']
  #allocation25 [shape = 's32[]', space=sflag, size = 0x4, offset = 0, fixed_abs, tag = 'sflag constant byte address 0x0 - dummy sync flag']
  %s0 = inlined_call_operand.hbm [shape: s32[24], index: 0, kind: input, shape index: {}]
  %s1 = inlined_call_operand.vmem [shape: s32[24], index: 1, kind: input, shape index: {}]
  %s2 = inlined_call_operand.vmem [shape: s32[192], index: 2, kind: input, shape index: {}]
  %s3 = inlined_call_operand.hbm [shape: f32[64,128], index: 3, kind: input, shape index: {}]
  %s4 = inlined_call_operand.hbm [shape: f32[64,128], index: 4, kind: input, shape index: {}]
  %s5 = inlined_call_operand.hbm [shape: f32[1,1], index: 5, kind: output, shape index: {}]
  %s6 = sld [smem:[#allocation0]]
  $region103: #{tpu_custom_call.1} parent=0
    _
  %s8 = ssub.s32 1, %s6
  %s9 = scalar_select 0, %s8, %s6
  %11 = dma.hbm_to_smem %s0, 16, [#allocation7], [#allocation6]
  %s12 = sshll.u32 %s1, 4
  %s13 = int_to_ptr.vmem [resolvable:$true] %s12
  %15 = dma.vmem_to_smem %s13, 16, [#allocation8], [#allocation6]
  %s16 = sshll.u32 %s2, 4
  %s17 = int_to_ptr.vmem [resolvable:$true] %s16
  %19 = dma.vmem_to_smem %s17, 32, [#allocation9], [#allocation6]
  %20 = dma.done [#allocation6], 64
  %21 = sfence
  $region1: #{tpu_custom_call.1} parent=0
    #allocation10 [shape = 'u8[512]{0}', space=vmem, size = 0x400, scoped, tag = 'output window, operand 0, single buffered']
    #allocation11 [shape = 's32[2]{0}', space=sflag, size = 0x8, scoped, tag = 'scoped memory for tpu_custom_call.1']
    %22 = vsyncpa [#allocation11], 0
    loop: start=0, step=1, limit=4
    $region2: #{tpu_custom_call.1} parent=1 // loop_pre_header
      _
    $region3: #{tpu_custom_call.1} parent=1 // loop_header
      %s24 = sphi 0, %s28
      %p25 = scmp.ge.s32.totalorder %s24, 4
      %s31 = sphi 0, %s31
      %s33 = sphi 0, %s31
      %s41 = sphi 0, %s33
    $region4: #{tpu_custom_call.1} parent=1 // loop_header_branch
      %27 = sbr.rel (%p25) target = $region8
    $region5: #{tpu_custom_call.1} parent=1 // loop_body
      %s29 = ssub.s32 %s24, 1
      %s30 = sadd.s32 %s24, 1
      %s32 = sadd.s32 %s31, 1
      %p34 = scmp.eq.s32.totalorder %s24, 2
      %p35 = scmp.ne.s32.totalorder %s31, %s33
      %p36 = scmp.eq.s32.totalorder %s24, 0
      %p37 = por %p35, %p36
      %p38 = scmp.ne.s32.totalorder %s31, %s33
      %p39 = scmp.eq.s32.totalorder %s29, 2
      %p40 = por %p38, %p39
      %p42 = scmp.ne.s32.totalorder %s33, %s41
      %p43 = scmp.eq.s32.totalorder %s29, 0
      %p44 = por %p42, %p43
      %p45 = scmp.lt.s32.totalorder %s24, 3
      // Predicated region
      $region9: #{tpu_custom_call.1} parent=5 // pred_check
        %p46 = pneg %p45
      $region10: #{tpu_custom_call.1} parent=5 // pred_check_branch
        %48 = sbr.rel (%p46) target = $region12
      $region11: #{tpu_custom_call.1} parent=5 // pred_region
        %p49 = pneg %p37
        %p50 = pneg %p34
        %p51 = scmp.lt.s32.totalorder %s24, 0
        %s52 = ssub.s32 0, %s24
        %s53 = scalar_select %p51, %s52, %s24
        %s54 = sand.u32 %s53, 1
        %s55 = ssub.s32 0, %s54
        %s56 = scalar_select %p51, %s55, %s54
        %p57 = scmp.eq.s32.totalorder %s24, 0
        // Predicated region
        $region13: #{tpu_custom_call.1} parent=11 // pred_check
          %p58 = pneg %p57
        $region14: #{tpu_custom_call.1} parent=11 // pred_check_branch
          %60 = sbr.rel (%p58) target = $region16
        $region15: #{tpu_custom_call.1} parent=11 // pred_region
          %vm61 = vcmask 0
          %62 = vst.msk [vmem:[#allocation10] sm:$0x1] %vm61, 0.0
          %s63 = smul.u32 %s24, 8
          loop: start=0, step=1, limit=8
          $region17: #{tpu_custom_call.1} parent=15 // loop_pre_header
            _
          $region18: #{tpu_custom_call.1} parent=15 // loop_header
            %s65 = sphi 0, %s69
            %p66 = scmp.ge.s32.totalorder %s65, 8
          $region19: #{tpu_custom_call.1} parent=15 // loop_header_branch
            %68 = sbr.rel (%p66) target = $region23
          $region20: #{tpu_custom_call.1} parent=15 // loop_body
            %s70 = sadd.s32 %s63, %s65
            %s71 = sld [smem:[#allocation7 + %s70]]
            %s72 = smul.addr %s71, 16
            %s73 = scalar_lea.hbm %s3, %s72
            %s74 = scalar_lea.vmem [#allocation2], %s65
            // Predicated region
            $region24: #{tpu_custom_call.1} parent=20 // pred_check
              _
            $region25: #{tpu_custom_call.1} parent=20 // pred_check_branch
              %76 = sbr.rel target = $region27
            $region26: #{tpu_custom_call.1} parent=20 // pred_region
              %77 = sst [smem:[#allocation14]] [#allocation13]
              %78 = sst [smem:[#allocation15]] [#allocation12]
            $region27: #{tpu_custom_call.1} parent=20 // pred_fallthru
              _
            %80 = shalt.err (0)
            %s82 = sshll.u32 %s74, 4
            %s83 = int_to_ptr.vmem [resolvable:$true] %s82
            %85 = dma.hbm_to_vmem [thread:$0]  %s73, 16, %s83, [#allocation5]
            %s86 = sld [smem:[#allocation8 + %s70]]
            %s87 = smul.addr %s86, 16
            %s88 = scalar_lea.hbm %s4, %s87
            %s89 = scalar_lea.vmem [#allocation3], %s65
            %s90 = scalar_lea.sflag [#allocation5], 2
            // Predicated region
            $region28: #{tpu_custom_call.1} parent=20 // pred_check
              _
            $region29: #{tpu_custom_call.1} parent=20 // pred_check_branch
              %92 = sbr.rel target = $region31
            $region30: #{tpu_custom_call.1} parent=20 // pred_region
              %93 = sst [smem:[#allocation14]] [#allocation17]
              %94 = sst [smem:[#allocation15]] [#allocation16]
            $region31: #{tpu_custom_call.1} parent=20 // pred_fallthru
              _
            %96 = shalt.err (0)
            %s98 = sshll.u32 %s89, 4
            %s99 = int_to_ptr.vmem [resolvable:$true] %s98
            %101 = dma.hbm_to_vmem [thread:$0]  %s88, 16, %s99, %s90
            loop: start=0, step=1, limit=8
            $region32: #{tpu_custom_call.1} parent=20 // loop_pre_header
              _
            $region33: #{tpu_custom_call.1} parent=20 // loop_header
              %s103 = sphi 0, %s107
              %p104 = scmp.ge.s32.totalorder %s103, 8
            $region34: #{tpu_custom_call.1} parent=20 // loop_header_branch
              %106 = sbr.rel (%p104) target = $region38
            $region35: #{tpu_custom_call.1} parent=20 // loop_body
              %s108 = smul.u32 %s70, 8
              %s109 = sadd.s32 %s108, %s103
              %s110 = sld [smem:[#allocation9 + %s109]]
              %s111 = smul.addr %s110, 16
              %s112 = scalar_lea.hbm %s4, %s111
              %s113 = smul.u32 %s65, 8
              %s114 = sadd.s32 %s103, %s113
              %s115 = scalar_lea.vmem [#allocation4], %s114
              %s116 = scalar_lea.sflag [#allocation5], 4
              // Predicated region
              $region39: #{tpu_custom_call.1} parent=35 // pred_check
                _
              $region40: #{tpu_custom_call.1} parent=35 // pred_check_branch
                %118 = sbr.rel target = $region42
              $region41: #{tpu_custom_call.1} parent=35 // pred_region
                %119 = sst [smem:[#allocation14]] [#allocation19]
                %120 = sst [smem:[#allocation15]] [#allocation18]
              $region42: #{tpu_custom_call.1} parent=35 // pred_fallthru
                _
              %122 = shalt.err (0)
              %s124 = sshll.u32 %s115, 4
              %s125 = int_to_ptr.vmem [resolvable:$true] %s124
              %127 = dma.hbm_to_vmem [thread:$0]  %s112, 16, %s125, %s116
            $region36: #{tpu_custom_call.1} parent=20 // loop_footer
              %s107 = sadd.s32 1, %s103
            $region37: #{tpu_custom_call.1} parent=20 // loop_footer_branch
              %102 = sbr.rel target = $region33
            $region38: #{tpu_custom_call.1} parent=20 // loop_exit
              _
          $region21: #{tpu_custom_call.1} parent=15 // loop_footer
            %s69 = sadd.s32 1, %s65
          $region22: #{tpu_custom_call.1} parent=15 // loop_footer_branch
            %64 = sbr.rel target = $region18
          $region23: #{tpu_custom_call.1} parent=15 // loop_exit
            _
        $region16: #{tpu_custom_call.1} parent=11 // pred_fallthru
          _
        %s128 = sadd.s32 %s24, 1
        %p129 = scmp.lt.s32.totalorder %s128, 3
        // Predicated region
        $region43: #{tpu_custom_call.1} parent=11 // pred_check
          %p130 = pneg %p129
        $region44: #{tpu_custom_call.1} parent=11 // pred_check_branch
          %132 = sbr.rel (%p130) target = $region46
        $region45: #{tpu_custom_call.1} parent=11 // pred_region
          %s133 = ssub.s32 1, %s56
          %s134 = smul.u32 %s128, 8
          loop: start=0, step=1, limit=8
          $region47: #{tpu_custom_call.1} parent=45 // loop_pre_header
            _
          $region48: #{tpu_custom_call.1} parent=45 // loop_header
            %s136 = sphi 0, %s140
            %p137 = scmp.ge.s32.totalorder %s136, 8
          $region49: #{tpu_custom_call.1} parent=45 // loop_header_branch
            %139 = sbr.rel (%p137) target = $region53
          $region50: #{tpu_custom_call.1} parent=45 // loop_body
            %s141 = sadd.s32 %s134, %s136
            %s142 = sld [smem:[#allocation7 + %s141]]
            %s143 = smul.addr %s142, 16
            %s144 = scalar_lea.hbm %s3, %s143
            %s145 = smul.u32 %s133, 8
            %s146 = sadd.s32 %s136, %s145
            %s147 = scalar_lea.vmem [#allocation2], %s146
            %s148 = scalar_lea.sflag [#allocation5], %s133
            // Predicated region
            $region54: #{tpu_custom_call.1} parent=50 // pred_check
              _
            $region55: #{tpu_custom_call.1} parent=50 // pred_check_branch
              %150 = sbr.rel target = $region57
            $region56: #{tpu_custom_call.1} parent=50 // pred_region
              %151 = sst [smem:[#allocation14]] [#allocation21]
              %152 = sst [smem:[#allocation15]] [#allocation20]
            $region57: #{tpu_custom_call.1} parent=50 // pred_fallthru
              _
            %154 = shalt.err (0)
            %s156 = sshll.u32 %s147, 4
            %s157 = int_to_ptr.vmem [resolvable:$true] %s156
            %159 = dma.hbm_to_vmem [thread:$0]  %s144, 16, %s157, %s148
            %s160 = sld [smem:[#allocation8 + %s141]]
            %s161 = smul.addr %s160, 16
            %s162 = scalar_lea.hbm %s4, %s161
            %s163 = scalar_lea.vmem [#allocation3], %s146
            %s164 = sadd.s32 %s133, 2
            %s165 = scalar_lea.sflag [#allocation5], %s164
            // Predicated region
            $region58: #{tpu_custom_call.1} parent=50 // pred_check
              _
            $region59: #{tpu_custom_call.1} parent=50 // pred_check_branch
              %167 = sbr.rel target = $region61
            $region60: #{tpu_custom_call.1} parent=50 // pred_region
              %168 = sst [smem:[#allocation14]] [#allocation23]
              %169 = sst [smem:[#allocation15]] [#allocation22]
            $region61: #{tpu_custom_call.1} parent=50 // pred_fallthru
              _
            %171 = shalt.err (0)
            %s173 = sshll.u32 %s163, 4
            %s174 = int_to_ptr.vmem [resolvable:$true] %s173
            %176 = dma.hbm_to_vmem [thread:$0]  %s162, 16, %s174, %s165
            loop: start=0, step=1, limit=8
            $region62: #{tpu_custom_call.1} parent=50 // loop_pre_header
              _
            $region63: #{tpu_custom_call.1} parent=50 // loop_header
              %s178 = sphi 0, %s182
              %p179 = scmp.ge.s32.totalorder %s178, 8
            $region64: #{tpu_custom_call.1} parent=50 // loop_header_branch
              %181 = sbr.rel (%p179) target = $region68
            $region65: #{tpu_custom_call.1} parent=50 // loop_body
              %s183 = smul.u32 %s141, 8
              %s184 = sadd.s32 %s183, %s178
              %s185 = sld [smem:[#allocation9 + %s184]]
              %s186 = smul.addr %s185, 16
              %s187 = scalar_lea.hbm %s4, %s186
              %s188 = smul.u32 %s136, 8
              %s189 = sadd.s32 %s178, %s188
              %s190 = smul.u32 %s133, 64
              %s191 = sadd.s32 %s189, %s190
              %s192 = scalar_lea.vmem [#allocation4], %s191
              %s193 = sadd.s32 %s133, 4
              %s194 = scalar_lea.sflag [#allocation5], %s193
              // Predicated region
              $region69: #{tpu_custom_call.1} parent=65 // pred_check
                _
              $region70: #{tpu_custom_call.1} parent=65 // pred_check_branch
                %196 = sbr.rel target = $region72
              $region71: #{tpu_custom_call.1} parent=65 // pred_region
                %197 = sst [smem:[#allocation14]] [#allocation25]
                %198 = sst [smem:[#allocation15]] [#allocation24]
              $region72: #{tpu_custom_call.1} parent=65 // pred_fallthru
                _
              %200 = shalt.err (0)
              %s202 = sshll.u32 %s192, 4
              %s203 = int_to_ptr.vmem [resolvable:$true] %s202
              %205 = dma.hbm_to_vmem [thread:$0]  %s187, 16, %s203, %s194
            $region66: #{tpu_custom_call.1} parent=50 // loop_footer
              %s182 = sadd.s32 1, %s178
            $region67: #{tpu_custom_call.1} parent=50 // loop_footer_branch
              %177 = sbr.rel target = $region63
            $region68: #{tpu_custom_call.1} parent=50 // loop_exit
              _
          $region51: #{tpu_custom_call.1} parent=45 // loop_footer
            %s140 = sadd.s32 1, %s136
          $region52: #{tpu_custom_call.1} parent=45 // loop_footer_branch
            %135 = sbr.rel target = $region48
          $region53: #{tpu_custom_call.1} parent=45 // loop_exit
            _
        $region46: #{tpu_custom_call.1} parent=11 // pred_fallthru
          _
        loop: start=0, step=1, limit=8
        $region73: #{tpu_custom_call.1} parent=11 // loop_pre_header
          _
        $region74: #{tpu_custom_call.1} parent=11 // loop_header
          %s207 = sphi 0, %s211
          %p208 = scmp.ge.s32.totalorder %s207, 8
        $region75: #{tpu_custom_call.1} parent=11 // loop_header_branch
          %210 = sbr.rel (%p208) target = $region79
        $region76: #{tpu_custom_call.1} parent=11 // loop_body
          %s212 = scalar_lea.sflag [#allocation5], %s56
          %s213 = smul.u32 1, 1
          %s214 = sshll.u32 %s213, 4
          %215 = dma.done %s212, %s214
          %s216 = sadd.s32 %s56, 2
          %s217 = scalar_lea.sflag [#allocation5], %s216
          %s218 = sshll.u32 %s213, 4
          %219 = dma.done %s217, %s218
        $region77: #{tpu_custom_call.1} parent=11 // loop_footer
          %s211 = sadd.s32 1, %s207
        $region78: #{tpu_custom_call.1} parent=11 // loop_footer_branch
          %206 = sbr.rel target = $region74
        $region79: #{tpu_custom_call.1} parent=11 // loop_exit
          _
        loop: start=0, step=1, limit=64
        $region80: #{tpu_custom_call.1} parent=11 // loop_pre_header
          _
        $region81: #{tpu_custom_call.1} parent=11 // loop_header
          %s221 = sphi 0, %s225
          %p222 = scmp.ge.s32.totalorder %s221, 64
        $region82: #{tpu_custom_call.1} parent=11 // loop_header_branch
          %224 = sbr.rel (%p222) target = $region86
        $region83: #{tpu_custom_call.1} parent=11 // loop_body
          %s226 = sadd.s32 %s56, 4
          %s227 = scalar_lea.sflag [#allocation5], %s226
          %s228 = smul.u32 1, 1
          %s229 = sshll.u32 %s228, 4
          %230 = dma.done %s227, %s229
        $region84: #{tpu_custom_call.1} parent=11 // loop_footer
          %s225 = sadd.s32 1, %s221
        $region85: #{tpu_custom_call.1} parent=11 // loop_footer_branch
          %220 = sbr.rel target = $region81
        $region86: #{tpu_custom_call.1} parent=11 // loop_exit
          _
        %s231 = smul.u32 %s56, 8
        %s232 = scalar_lea.vmem [#allocation2], %s231
        %v233 = vld [vmem:[%s232] sm:$0xff]
        %s234 = scalar_lea.vmem [#allocation3], %s231
        %v235 = vld [vmem:[%s234] sm:$0xff]
        %s236 = smul.u32 %s56, 64
        %s237 = scalar_lea.vmem [#allocation4], %s236
        %v238 = vld [vmem:[%s237] sm:$0xff]
        %v239 = vld [vmem:[%s237 + $0x8] sm:$0xff]
        %v240 = vld [vmem:[%s237 + $0x10] sm:$0xff]
        %v241 = vld [vmem:[%s237 + $0x18] sm:$0xff]
        %v242 = vld [vmem:[%s237 + $0x20] sm:$0xff]
        %v243 = vld [vmem:[%s237 + $0x28] sm:$0xff]
        %v244 = vld [vmem:[%s237 + $0x30] sm:$0xff]
        %v245 = vld [vmem:[%s237 + $0x38] sm:$0xff]
        %v246 = vmul.f32 %v233, %v235
        %247 = vadd.xlane.f32.xlu0 %v246
        %v248 = vpop.xlane.xlu0 %247
        %v249 = vmax.f32 %v248, -10.0
        %v250 = vmin.f32 %v249, 10.0
        %v251 = vsub.f32 0.0, %v250
        %v252 = vmul.f32 %v251, 1.442695
        %v253 = vpow.pop %v252
        %v254 = vadd.f32 %v253, 1.0
        %v255 = vlog2.pop %v254
        %v256 = vmul.f32 %v255, 0.6931472
        %v257 = vmul.f32 -0.5, %v253
        %v258 = vadd.f32 %v257, 1.0
        %v259 = vmul.f32 %v258, %v253
        %v260 = vand.u32 2147483647, %v253
        %vm261 = vcmp.lt.f32.partialorder %v260, 0.0004427343
        %v262 = vsel %vm261, %v259, %v256
        %v264 = vcombine.high %v233, %v233
        %v266 = vunpack.c.l.s4 1966171168
        %v267 = vunpack.c.0.s8 %v266
        %v268 = vlaneseq
        %v269 = vshrl.u32 %v268, 7
        %v270 = vsub.s32 %v267, %v269
        %v271 = vrot.slane %v233, %v270
        %v273 = vunpack.c.l.s4 1966171168
        %v274 = vunpack.c.0.s8 %v273
        %v275 = vlaneseq
        %v276 = vshrl.u32 %v275, 7
        %v277 = vsub.s32 %v274, %v276
        %v278 = vrot.slane %v264, %v277
        %v279 = vcombine.high %v271, %v271
        %v280 = vcombine.high %v278, %v278
        %v282 = vunpack.c.l.s4 1966171168
        %v283 = vunpack.c.0.s8 %v282
        %v284 = vlaneseq
        %v285 = vshrl.u32 %v284, 7
        %v286 = vsub.s32 %v283, %v285
        %v287 = vrot.slane %v271, %v286
        %v289 = vunpack.c.l.s4 1966171168
        %v290 = vunpack.c.0.s8 %v289
        %v291 = vlaneseq
        %v292 = vshrl.u32 %v291, 7
        %v293 = vsub.s32 %v290, %v292
        %v294 = vrot.slane %v278, %v293
        %v296 = vunpack.c.l.s4 1966171168
        %v297 = vunpack.c.0.s8 %v296
        %v298 = vlaneseq
        %v299 = vshrl.u32 %v298, 7
        %v300 = vsub.s32 %v297, %v299
        %v301 = vrot.slane %v279, %v300
        %v303 = vunpack.c.l.s4 1966171168
        %v304 = vunpack.c.0.s8 %v303
        %v305 = vlaneseq
        %v306 = vshrl.u32 %v305, 7
        %v307 = vsub.s32 %v304, %v306
        %v308 = vrot.slane %v280, %v307
        %v309 = vcombine.high %v287, %v287
        %v310 = vcombine.high %v294, %v294
        %v311 = vcombine.high %v301, %v301
        %v312 = vcombine.high %v308, %v308
        %v313 = vlaneseq
        %v314 = vshrl.u32 %v313, 7
        %v315 = vsub.s32 0, %v314
        %v316 = vrot.slane %v287, %v315
        %v317 = vlaneseq
        %v318 = vshrl.u32 %v317, 7
        %v319 = vsub.s32 0, %v318
        %v320 = vrot.slane %v301, %v319
        %v321 = vlaneseq
        %v322 = vshrl.u32 %v321, 7
        %v323 = vsub.s32 0, %v322
        %v324 = vrot.slane %v309, %v323
        %v325 = vlaneseq
        %v326 = vshrl.u32 %v325, 7
        %v327 = vsub.s32 0, %v326
        %v328 = vrot.slane %v311, %v327
        %v329 = vlaneseq
        %v330 = vshrl.u32 %v329, 7
        %v331 = vsub.s32 0, %v330
        %v332 = vrot.slane %v294, %v331
        %v333 = vlaneseq
        %v334 = vshrl.u32 %v333, 7
        %v335 = vsub.s32 0, %v334
        %v336 = vrot.slane %v308, %v335
        %v337 = vlaneseq
        %v338 = vshrl.u32 %v337, 7
        %v339 = vsub.s32 0, %v338
        %v340 = vrot.slane %v310, %v339
        %v341 = vlaneseq
        %v342 = vshrl.u32 %v341, 7
        %v343 = vsub.s32 0, %v342
        %v344 = vrot.slane %v312, %v343
        %v353 = vmul.f32 %v238, %v316
        %v354 = vmul.f32 %v239, %v320
        %v355 = vmul.f32 %v240, %v324
        %v356 = vmul.f32 %v241, %v328
        %v357 = vmul.f32 %v242, %v332
        %v358 = vmul.f32 %v243, %v336
        %v359 = vmul.f32 %v244, %v340
        %v360 = vmul.f32 %v245, %v344
        %361 = vadd.xlane.f32.xlu0 %v353
        %v362 = vpop.xlane.xlu0 %361
        %363 = vadd.xlane.f32.xlu0 %v354
        %v364 = vpop.xlane.xlu0 %363
        %365 = vadd.xlane.f32.xlu0 %v355
        %v366 = vpop.xlane.xlu0 %365
        %367 = vadd.xlane.f32.xlu0 %v356
        %v368 = vpop.xlane.xlu0 %367
        %369 = vadd.xlane.f32.xlu0 %v357
        %v370 = vpop.xlane.xlu0 %369
        %371 = vadd.xlane.f32.xlu0 %v358
        %v372 = vpop.xlane.xlu0 %371
        %373 = vadd.xlane.f32.xlu0 %v359
        %v374 = vpop.xlane.xlu0 %373
        %375 = vadd.xlane.f32.xlu0 %v360
        %v376 = vpop.xlane.xlu0 %375
        %v377 = vmax.f32 %v362, -10.0
        %v378 = vmax.f32 %v364, -10.0
        %v379 = vmax.f32 %v366, -10.0
        %v380 = vmax.f32 %v368, -10.0
        %v381 = vmax.f32 %v370, -10.0
        %v382 = vmax.f32 %v372, -10.0
        %v383 = vmax.f32 %v374, -10.0
        %v384 = vmax.f32 %v376, -10.0
        %v385 = vmin.f32 %v377, 10.0
        %v386 = vmin.f32 %v378, 10.0
        %v387 = vmin.f32 %v379, 10.0
        %v388 = vmin.f32 %v380, 10.0
        %v389 = vmin.f32 %v381, 10.0
        %v390 = vmin.f32 %v382, 10.0
        %v391 = vmin.f32 %v383, 10.0
        %v392 = vmin.f32 %v384, 10.0
        %v393 = vmul.f32 %v385, 1.442695
        %v394 = vpow.pop %v393
        %v395 = vmul.f32 %v386, 1.442695
        %v396 = vpow.pop %v395
        %v397 = vmul.f32 %v387, 1.442695
        %v398 = vpow.pop %v397
        %v399 = vmul.f32 %v388, 1.442695
        %v400 = vpow.pop %v399
        %v401 = vmul.f32 %v389, 1.442695
        %v402 = vpow.pop %v401
        %v403 = vmul.f32 %v390, 1.442695
        %v404 = vpow.pop %v403
        %v405 = vmul.f32 %v391, 1.442695
        %v406 = vpow.pop %v405
        %v407 = vmul.f32 %v392, 1.442695
        %v408 = vpow.pop %v407
        %v409 = vadd.f32 %v394, 1.0
        %v410 = vlog2.pop %v409
        %v411 = vmul.f32 %v410, 0.6931472
        %v412 = vmul.f32 -0.5, %v394
        %v413 = vadd.f32 %v412, 1.0
        %v414 = vmul.f32 %v413, %v394
        %v415 = vand.u32 2147483647, %v394
        %vm416 = vcmp.lt.f32.partialorder %v415, 0.0004427343
        %v417 = vsel %vm416, %v414, %v411
        %v418 = vadd.f32 %v396, 1.0
        %v419 = vlog2.pop %v418
        %v420 = vmul.f32 %v419, 0.6931472
        %v421 = vmul.f32 -0.5, %v396
        %v422 = vadd.f32 %v421, 1.0
        %v423 = vmul.f32 %v422, %v396
        %v424 = vand.u32 2147483647, %v396
        %vm425 = vcmp.lt.f32.partialorder %v424, 0.0004427343
        %v426 = vsel %vm425, %v423, %v420
        %v427 = vadd.f32 %v398, 1.0
        %v428 = vlog2.pop %v427
        %v429 = vmul.f32 %v428, 0.6931472
        %v430 = vmul.f32 -0.5, %v398
        %v431 = vadd.f32 %v430, 1.0
        %v432 = vmul.f32 %v431, %v398
        %v433 = vand.u32 2147483647, %v398
        %vm434 = vcmp.lt.f32.partialorder %v433, 0.0004427343
        %v435 = vsel %vm434, %v432, %v429
        %v436 = vadd.f32 %v400, 1.0
        %v437 = vlog2.pop %v436
        %v438 = vmul.f32 %v437, 0.6931472
        %v439 = vmul.f32 -0.5, %v400
        %v440 = vadd.f32 %v439, 1.0
        %v441 = vmul.f32 %v440, %v400
        %v442 = vand.u32 2147483647, %v400
        %vm443 = vcmp.lt.f32.partialorder %v442, 0.0004427343
        %v444 = vsel %vm443, %v441, %v438
        %v445 = vadd.f32 %v402, 1.0
        %v446 = vlog2.pop %v445
        %v447 = vmul.f32 %v446, 0.6931472
        %v448 = vmul.f32 -0.5, %v402
        %v449 = vadd.f32 %v448, 1.0
        %v450 = vmul.f32 %v449, %v402
        %v451 = vand.u32 2147483647, %v402
        %vm452 = vcmp.lt.f32.partialorder %v451, 0.0004427343
        %v453 = vsel %vm452, %v450, %v447
        %v454 = vadd.f32 %v404, 1.0
        %v455 = vlog2.pop %v454
        %v456 = vmul.f32 %v455, 0.6931472
        %v457 = vmul.f32 -0.5, %v404
        %v458 = vadd.f32 %v457, 1.0
        %v459 = vmul.f32 %v458, %v404
        %v460 = vand.u32 2147483647, %v404
        %vm461 = vcmp.lt.f32.partialorder %v460, 0.0004427343
        %v462 = vsel %vm461, %v459, %v456
        %v463 = vadd.f32 %v406, 1.0
        %v464 = vlog2.pop %v463
        %v465 = vmul.f32 %v464, 0.6931472
        %v466 = vmul.f32 -0.5, %v406
        %v467 = vadd.f32 %v466, 1.0
        %v468 = vmul.f32 %v467, %v406
        %v469 = vand.u32 2147483647, %v406
        %vm470 = vcmp.lt.f32.partialorder %v469, 0.0004427343
        %v471 = vsel %vm470, %v468, %v465
        %v472 = vadd.f32 %v408, 1.0
        %v473 = vlog2.pop %v472
        %v474 = vmul.f32 %v473, 0.6931472
        %v475 = vmul.f32 -0.5, %v408
        %v476 = vadd.f32 %v475, 1.0
        %v477 = vmul.f32 %v476, %v408
        %v478 = vand.u32 2147483647, %v408
        %vm479 = vcmp.lt.f32.partialorder %v478, 0.0004427343
        %v480 = vsel %vm479, %v477, %v474
        %v489 = vlaneseq
        %v490 = vand.u32 %v489, 127
        %v491 = vlaneseq
        %v492 = vshrl.u32 %v491, 7
        %v493 = vsub.s32 %v490, %v492
        %v494 = vrot.slane %v417, %v493
        %v495 = vlaneseq
        %v496 = vshrl.u32 %v495, 7
        %v497 = vsub.s32 %v490, %v496
        %v498 = vrot.slane %v426, %v497
        %v499 = vlaneseq
        %v500 = vshrl.u32 %v499, 7
        %v501 = vsub.s32 %v490, %v500
        %v502 = vrot.slane %v435, %v501
        %v503 = vlaneseq
        %v504 = vshrl.u32 %v503, 7
        %v505 = vsub.s32 %v490, %v504
        %v506 = vrot.slane %v444, %v505
        %v507 = vlaneseq
        %v508 = vshrl.u32 %v507, 7
        %v509 = vsub.s32 %v490, %v508
        %v510 = vrot.slane %v453, %v509
        %v511 = vlaneseq
        %v512 = vshrl.u32 %v511, 7
        %v513 = vsub.s32 %v490, %v512
        %v514 = vrot.slane %v462, %v513
        %v515 = vlaneseq
        %v516 = vshrl.u32 %v515, 7
        %v517 = vsub.s32 %v490, %v516
        %v518 = vrot.slane %v471, %v517
        %v519 = vlaneseq
        %v520 = vshrl.u32 %v519, 7
        %v521 = vsub.s32 %v490, %v520
        %v522 = vrot.slane %v480, %v521
        %vm523 = vcmask 1041409
        %v524 = vsel %vm523, %v498, %v494
        %vm525 = vcmask 1042434
        %v526 = vsel %vm525, %v502, %v524
        %vm527 = vcmask 1043459
        %v528 = vsel %vm527, %v506, %v526
        %vm529 = vcmask 1044484
        %v530 = vsel %vm529, %v510, %v528
        %vm531 = vcmask 1045509
        %v532 = vsel %vm531, %v514, %v530
        %vm533 = vcmask 1046534
        %v534 = vsel %vm533, %v518, %v532
        %vm535 = vcmask 1047559
        %v536 = vsel %vm535, %v522, %v534
        %vm538 = vcmask 64512
        %v539 = vsel %vm538, %v536, 0.0
        %540 = vadd.xlane.f32.xlu0 %v539
        %v541 = vpop.xlane.xlu0 %540
        %v542 = vadd.f32 %v262, %v541
        %v543 = vlaneseq
        %v544 = vshrl.u32 %v543, 7
        %s545 = smul.u32 %s24, 8
        %v546 = vstv %s545
        %v547 = vadd.s32 %v544, %v546
        %vm548 = vcmp.lt.s32.totalorder %v547, 20
        %v549 = vsel %vm548, %v542, 0.0
        %v550 = vld [vmem:[#allocation10] sm:$0x1]
        %v551 = vrot.slane %v549, 4
        %v552 = vadd.f32 %v549, %v551
        %v553 = vrot.slane %v552, 2
        %v554 = vadd.f32 %v552, %v553
        %v555 = vrot.slane %v554, 1
        %v556 = vadd.f32 %v554, %v555
        %v557 = vadd.f32 %v550, %v556
        %vm558 = vcmask 0
        %559 = vst.msk [vmem:[#allocation10] sm:$0x1] %vm558, %v557
        %p560 = scmp.eq.s32.totalorder %s24, 2
        // Predicated region
        $region87: #{tpu_custom_call.1} parent=11 // pred_check
          %p561 = pneg %p560
        $region88: #{tpu_custom_call.1} parent=11 // pred_check_branch
          %563 = sbr.rel (%p561) target = $region90
        $region89: #{tpu_custom_call.1} parent=11 // pred_region
          %v564 = vld [vmem:[#allocation10] sm:$0x1]
          %v565 = vmul.f32 %v564, 0.05
          %566 = vst.msk [vmem:[#allocation10] sm:$0x1] %vm558, %v565
        $region90: #{tpu_custom_call.1} parent=11 // pred_fallthru
          _
        // Predicated region
        $region91: #{tpu_custom_call.1} parent=11 // pred_check
          %p567 = pneg %p34
        $region92: #{tpu_custom_call.1} parent=11 // pred_check_branch
          %569 = sbr.rel (%p567) target = $region94
        $region93: #{tpu_custom_call.1} parent=11 // pred_region
          %s571 = ssub.s32 16, 16
          %572 = vsyncadd [#allocation11], %s571
          %s574 = sshll.u32 [#allocation10], 4
          %s575 = int_to_ptr.vmem [resolvable:$true] %s574
          %577 = dma.vmem_to_hbm [thread:$0]  %s575, 16, %s5, [#allocation11]
        $region94: #{tpu_custom_call.1} parent=11 // pred_fallthru
          _
        // Predicated region
        $region95: #{tpu_custom_call.1} parent=11 // pred_check
          %p578 = pneg %p34
        $region96: #{tpu_custom_call.1} parent=11 // pred_check_branch
          %580 = sbr.rel (%p578) target = $region98
        $region97: #{tpu_custom_call.1} parent=11 // pred_region
          %581 = dma.done [#allocation11], 16
        $region98: #{tpu_custom_call.1} parent=11 // pred_fallthru
          _
      $region12: #{tpu_custom_call.1} parent=5 // pred_fallthru
        _
      %p582 = scmp.le.s32.totalorder 1, %s24
      // Predicated region
      $region99: #{tpu_custom_call.1} parent=5 // pred_check
        %p583 = pneg %p582
      $region100: #{tpu_custom_call.1} parent=5 // pred_check_branch
        %585 = sbr.rel (%p583) target = $region102
      $region101: #{tpu_custom_call.1} parent=5 // pred_region
        %s586 = ssub.s32 %s24, 1
      $region102: #{tpu_custom_call.1} parent=5 // pred_fallthru
        _
    $region6: #{tpu_custom_call.1} parent=1 // loop_footer
      %s28 = sadd.s32 1, %s24
    $region7: #{tpu_custom_call.1} parent=1 // loop_footer_branch
      %23 = sbr.rel target = $region3
    $region8: #{tpu_custom_call.1} parent=1 // loop_exit
      _
    %587 = vsyncpa [#allocation11], 1
    %s588 = scalar_lea.sflag [#allocation11], 1
    %589 = vsyncpa %s588, 1
  %590 = vsyncmov [#allocation5]
  %s591 = vpop.sfrf %590
  %p592 = scmp.eq.s32.totalorder %s591, 0
  %p593 = pneg %p592
  %595 = shalt.err (%p593)
  %s596 = scalar_lea.sflag [#allocation5], 1
  %597 = vsyncmov %s596
  %s598 = vpop.sfrf %597
  %p599 = scmp.eq.s32.totalorder %s598, 0
  %p600 = pneg %p599
  %602 = shalt.err (%p600)
  %s603 = scalar_lea.sflag [#allocation5], 2
  %604 = vsyncmov %s603
  %s605 = vpop.sfrf %604
  %p606 = scmp.eq.s32.totalorder %s605, 0
  %p607 = pneg %p606
  %609 = shalt.err (%p607)
  %s610 = scalar_lea.sflag [#allocation5], 3
  %611 = vsyncmov %s610
  %s612 = vpop.sfrf %611
  %p613 = scmp.eq.s32.totalorder %s612, 0
  %p614 = pneg %p613
  %616 = shalt.err (%p614)
  %s617 = scalar_lea.sflag [#allocation5], 4
  %618 = vsyncmov %s617
  %s619 = vpop.sfrf %618
  %p620 = scmp.eq.s32.totalorder %s619, 0
  %p621 = pneg %p620
  %623 = shalt.err (%p621)
  %s624 = scalar_lea.sflag [#allocation5], 5
  %625 = vsyncmov %s624
  %s626 = vpop.sfrf %625
  %p627 = scmp.eq.s32.totalorder %s626, 0
  %p628 = pneg %p627
  %630 = shalt.err (%p628)

</llo_original>
